<compile_context>
chip_gen: v6e
topology: v6e:2x2x1
jax: 0.10.0
libtpu: 0.0.40
codegen_flags: <defaults>
</compile_context>

<pallas_src>
import jax
import jax.numpy as jnp
from jax.experimental import pallas as pl
from jax.experimental.pallas import tpu as pltpu


def _round_up(x, m):
    return ((x + m - 1) // m) * m


def _bert_cnn_head_kernel(enc_ref, wp_ref, bias_ref, lim_ref, wfc_ref, bfc_ref,
                          out_ref, carry_ref, acc_ref):
    """Fused packed-conv + ReLU + running max-pool + final Linear.

    enc_ref  : (Bt, St, H)             encoder tile (current seq tile)
    wp_ref   : (H, n_taps * n_out)     packed conv weights (one 128-wide block per tap)
    bias_ref : (1, n_out)              packed conv bias
    lim_ref  : (1, n_out)              per-column last valid window start (S - k_i)
    wfc_ref  : (n_out, n_cls)          padded fc_cnn weight
    bfc_ref  : (1, n_cls)              padded fc_cnn bias
    out_ref  : (Bt, n_cls)             padded logits (written on last seq tile)
    carry_ref: (Bt, halo, n_taps*n_out) packed-conv halo rows carried across seq tiles
    acc_ref  : (Bt, n_out)             running max accumulator
    """
    s = pl.program_id(1)
    n_seq = pl.num_programs(1)

    Bt, St, H = enc_ref.shape
    halo = carry_ref.shape[1]
    n_out = acc_ref.shape[-1]
    n_pack = wp_ref.shape[-1]
    n_taps = n_pack // n_out

    @pl.when(s == 0)
    def _init():
        acc_ref[...] = jnp.zeros_like(acc_ref)
        carry_ref[...] = jnp.zeros_like(carry_ref)

    # Packed conv-as-matmul: one big lane-dense MXU matmul for the whole tile.
    # Batch and seq rows are collapsed into the M dim (St is a multiple of 8,
    # H is the full minor dim, so the reshape is a layout-free collapse).
    y = jnp.dot(enc_ref[...].reshape(Bt * St, H), wp_ref[...],
                preferred_element_type=jnp.float32).reshape(Bt, St, n_pack)

    # Prepend the packed-conv halo rows of the previous seq tile (both pieces
    # are sublane-aligned: halo and St are multiples of 8).
    y_ext = jnp.concatenate([carry_ref[...], y], axis=1)   # (Bt, St+halo, n_pack)

    # Combine taps with shifted adds on the small packed result
    # (shift the n_out-wide result, not the H-wide input).
    conv = y_ext[:, 0:St, 0:n_out]
    for j in range(1, n_taps):
        conv = conv + y_ext[:, j:j + St, j * n_out:(j + 1) * n_out]
    conv = jnp.maximum(conv + bias_ref[...][None, :, :], 0.0)   # bias + ReLU

    # Mask windows that start before row 0 (zero carry at s==0) or would read
    # past the true (un-padded) sequence length; 0 is neutral post-ReLU.
    start = s * St - halo
    row = jax.lax.broadcasted_iota(jnp.int32, (St, n_out), 0) + start
    valid = (row >= 0) & (row <= lim_ref[...])
    conv = jnp.where(valid[None, :, :], conv, 0.0)

    # Running max-pool over time (associative across seq tiles).
    acc_ref[...] = jnp.maximum(acc_ref[...], jnp.max(conv, axis=1))

    # Carry the packed-conv rows of the last `halo` encoder rows to the next
    # sequence tile (cross-tile conv windows).
    carry_ref[...] = y[:, St - halo:St, :]

    @pl.when(s == n_seq - 1)
    def _finalize():
        # Dropout is identity in inference/eval mode.
        logits = jnp.dot(acc_ref[...], wfc_ref[...],
                         preferred_element_type=jnp.float32)
        out_ref[...] = (logits + bfc_ref[...]).astype(out_ref.dtype)


def bert_cnn_head(encoder_out, conv_params, fc_w, fc_b, *,
                  seq_tile=128, batch_tile=8):
    """encoder_out: (B, S, H); conv_params: list of ((F, k, H), (1, F));
    fc_w: (F * n_groups, C); fc_b: (1, C). Returns (B, C) logits."""
    B, S, H = encoder_out.shape
    n_groups = len(conv_params)
    F = int(conv_params[0][0].shape[0])
    sizes = [int(w.shape[1]) for w, _ in conv_params]
    k_min, k_max = min(sizes), max(sizes)
    C = int(fc_w.shape[1])

    n_out = _round_up(n_groups * F, 128)        # lane-dense packed feature dim
    n_pack = k_max * n_out                      # one 128-wide block per tap
    n_cls = _round_up(C, 128)                   # lane-dense logits
    halo = _round_up(k_max - 1, 8)              # sublane-aligned conv halo

    # --- batch tiling (out block (Bt, n_cls): Bt mult of 8 or == B_pad) ---
    if B <= batch_tile:
        bt, b_pad = B, B
    else:
        bt = max(8, (batch_tile // 8) * 8)
        b_pad = _round_up(B, bt)

    # --- sequence tiling: every valid window start t in [0, S - k_i] is
    # covered by some tile row r with t = s*St - halo + r, r in [0, St). ---
    need = S - k_min + halo + 1
    n_seq = max(1, -(-need // seq_tile))
    st = _round_up(max(-(-need // n_seq), halo), 8)
    s_pad = n_seq * st

    enc_p = jnp.pad(encoder_out, ((0, b_pad - B), (0, s_pad - S), (0, 0)))

    # --- pack all taps of all filter sizes into one lane-dense weight matrix.
    wp = jnp.zeros((H, n_pack), jnp.float32)
    bias_p = jnp.zeros((1, n_out), jnp.float32)
    lim = jnp.full((1, n_out), -1, jnp.int32)
    for i, (w, b) in enumerate(conv_params):
        k_i = int(w.shape[1])
        for j in range(k_i):
            col = j * n_out + i * F
            wp = wp.at[:, col:col + F].set(w[:, j, :].T.astype(jnp.float32))
        bias_p = bias_p.at[0, i * F:(i + 1) * F].set(
            b.reshape(-1).astype(jnp.float32))
        lim = lim.at[0, i * F:(i + 1) * F].set(S - k_i)

    wfc_p = jnp.zeros((n_out, n_cls), jnp.float32)
    wfc_p = wfc_p.at[:n_groups * F, :C].set(fc_w.astype(jnp.float32))
    bfc_p = jnp.zeros((1, n_cls), jnp.float32)
    bfc_p = bfc_p.at[0, :C].set(fc_b.reshape(-1).astype(jnp.float32))

    # --- scoped-VMEM budget: double-buffered enc/out/const blocks + scratch +
    # in-kernel value temporaries, with margin; clamped for v5e/v6e/v7x. ---
    item = jnp.dtype(encoder_out.dtype).itemsize
    tmp_vals = 4 * (2 * bt * (st + halo) * n_pack + 2 * bt * st * n_out)
    vmem_need = (2 * bt * st * H * item
                 + 2 * bt * n_cls * 4
                 + 2 * 4 * (H * n_pack + 2 * n_out + n_out * n_cls + n_cls)
                 + 4 * (bt * halo * n_pack + bt * n_out)
                 + tmp_vals)
    vmem_limit = int(min(max(vmem_need + (8 << 20), 16 << 20), 48 << 20))

    out_full = pl.pallas_call(
        _bert_cnn_head_kernel,
        out_shape=jax.ShapeDtypeStruct((b_pad, n_cls), jnp.float32),
        grid=(b_pad // bt, n_seq),
        in_specs=[
            pl.BlockSpec((bt, st, H), lambda b, s: (b, s, 0)),
            pl.BlockSpec((H, n_pack), lambda b, s: (0, 0)),
            pl.BlockSpec((1, n_out), lambda b, s: (0, 0)),
            pl.BlockSpec((1, n_out), lambda b, s: (0, 0)),
            pl.BlockSpec((n_out, n_cls), lambda b, s: (0, 0)),
            pl.BlockSpec((1, n_cls), lambda b, s: (0, 0)),
        ],
        out_specs=pl.BlockSpec((bt, n_cls), lambda b, s: (b, 0)),
        scratch_shapes=[
            pltpu.VMEM((bt, halo, n_pack), jnp.float32),
            pltpu.VMEM((bt, n_out), jnp.float32),
        ],
        compiler_params=pltpu.CompilerParams(
            dimension_semantics=("parallel", "arbitrary"),
            vmem_limit_bytes=vmem_limit),
    )(enc_p, wp, bias_p, lim, wfc_p, bfc_p)

    return out_full[:B, :C]


def synthetic_bert_encoder(context, mask, embedding_table):
    # TODO(synk): BertModel.from_pretrained (12-layer pretrained encoder) cannot
    # be reproduced without a checkpoint; stand in with a deterministic
    # embedding lookup whose padded positions are zeroed by the attention mask.
    enc = embedding_table[context]                       # (B, S, H)
    enc = enc * mask[..., None].astype(enc.dtype)
    return enc


def reference_head(enc, conv_params, fc_w, fc_b):
    """Plain-JAX reference of conv_and_pool + concat + fc_cnn (eval mode)."""
    feats = []
    for w, b in conv_params:                             # w: (F, k, H), b: (1, F)
        k = int(w.shape[1])
        L = enc.shape[1] - k + 1
        cols = []
        for t in range(L):
            cols.append(jnp.einsum("bkh,fkh->bf", enc[:, t:t + k, :], w,
                                   precision=jax.lax.Precision.HIGHEST))
        conv = jnp.stack(cols, axis=1) + b[:, None, :]   # (B, L, F)
        conv = jnp.maximum(conv, 0.0)
        feats.append(jnp.max(conv, axis=1))              # (B, F)
    feat = jnp.concatenate(feats, axis=-1)
    return jnp.dot(feat, fc_w, precision=jax.lax.Precision.HIGHEST) + fc_b


if __name__ == "__main__":
    # Small shapes consistent with the module's forward.
    B, S, H = 2, 8, 32               # batch, seq (pad_size), hidden_size
    vocab = 30
    num_filters = 4                  # config.num_filters
    filter_sizes = (2, 3, 4)         # config.filter_sizes
    num_classes = 3                  # config.num_classes

    key = jax.random.PRNGKey(0)
    k_ctx, k_emb, k_conv, k_fc = jax.random.split(key, 4)

    # x = (context, seq_len, mask) as in the dataset iterator of this repo.
    context = jax.random.randint(k_ctx, (B, S), 0, vocab, dtype=jnp.int32)
    seq_len = jnp.full((B,), S, dtype=jnp.int32)         # x[1] (unused by forward)
    mask = jnp.ones((B, S), dtype=jnp.int32)             # x[2]
    x = (context, seq_len, mask)

    # Deterministic parameters.
    embedding_table = 0.1 * jax.random.normal(k_emb, (vocab, H), jnp.float32)

    conv_params = []
    ck = k_conv
    for ksz in filter_sizes:
        ck, k_w, k_b = jax.random.split(ck, 3)
        w = 0.1 * jax.random.normal(k_w, (num_filters, ksz, H), jnp.float32)
        b = 0.1 * jax.random.normal(k_b, (1, num_filters), jnp.float32)
        conv_params.append((w, b))

    k_fw, k_fb = jax.random.split(k_fc)
    fc_w = 0.1 * jax.random.normal(
        k_fw, (num_filters * len(filter_sizes), num_classes), jnp.float32)
    fc_b = 0.1 * jax.random.normal(k_fb, (1, num_classes), jnp.float32)

    # forward: context = x[0]; mask = x[2]; encoder_out = bert(...)
    encoder_out = synthetic_bert_encoder(x[0], x[2], embedding_table)

    out = bert_cnn_head(encoder_out, conv_params, fc_w, fc_b)
    out = jax.block_until_ready(out)
    assert out.shape == (B, num_classes)

    ref = reference_head(encoder_out, conv_params, fc_w, fc_b)
    max_err = float(jnp.max(jnp.abs(out - ref)))
    assert max_err < 5e-3, f"kernel/reference mismatch: max abs err {max_err}"
    print("KERNEL_OK")
</pallas_src>

<mosaic_0001>
module attributes {stable_mosaic.version = 11 : i64} {
  func.func @_bert_cnn_head_kernel(%arg0: i32, %arg1: i32, %arg2: memref<2x16x32xf32, #tpu.memory_space<vmem>>, %arg3: memref<32x512xf32, #tpu.memory_space<vmem>>, %arg4: memref<1x128xf32, #tpu.memory_space<vmem>>, %arg5: memref<1x128xi32, #tpu.memory_space<vmem>>, %arg6: memref<128x128xf32, #tpu.memory_space<vmem>>, %arg7: memref<1x128xf32, #tpu.memory_space<vmem>>, %arg8: memref<2x128xf32, #tpu.memory_space<vmem>>, %arg9: memref<2x8x512xf32, #tpu.memory_space<vmem>>, %arg10: memref<2x128xf32, #tpu.memory_space<vmem>>) attributes {dimension_semantics = [#tpu.dimension_semantics<parallel>, #tpu.dimension_semantics<arbitrary>], iteration_bounds = array<i64: 1, 1>, scalar_prefetch = 0 : i64, scratch_operands = 2 : i64, tpu.core_type = #tpu.core_type<tc>, window_params = [{transform_indices = @transform_0, window_bounds = array<i64: 2, 16, 32>}, {pipeline_mode = #tpu.pipeline_mode<synchronous>, transform_indices = @transform_1, window_bounds = array<i64: 32, 512>}, {pipeline_mode = #tpu.pipeline_mode<synchronous>, transform_indices = @transform_2, window_bounds = array<i64: 1, 128>}, {pipeline_mode = #tpu.pipeline_mode<synchronous>, transform_indices = @transform_3, window_bounds = array<i64: 1, 128>}, {pipeline_mode = #tpu.pipeline_mode<synchronous>, transform_indices = @transform_4, window_bounds = array<i64: 128, 128>}, {pipeline_mode = #tpu.pipeline_mode<synchronous>, transform_indices = @transform_5, window_bounds = array<i64: 1, 128>}, {transform_indices = @transform_6, window_bounds = array<i64: 2, 128>}]} {
    %c0_i32 = arith.constant 0 : i32
    %0 = arith.cmpi eq, %arg1, %c0_i32 : i32
    %1 = arith.extui %0 : i1 to i32
    %c0_i32_0 = arith.constant 0 : i32
    %2 = arith.cmpi ne, %1, %c0_i32_0 : i32
    scf.if %2 {
      %cst_25 = arith.constant 0.000000e+00 : f32
      %48 = vector.broadcast %cst_25 : f32 to vector<2x128xf32>
      %c0_26 = arith.constant 0 : index
      %c0_27 = arith.constant 0 : index
      %49 = vector.load %arg10[%c0_26, %c0_27] : memref<2x128xf32, #tpu.memory_space<vmem>>, vector<2x128xf32>
      tpu.vector_store %arg10[%c0_26, %c0_27], %48 {strides = array<i32>} : memref<2x128xf32, #tpu.memory_space<vmem>>, vector<2x128xf32>,
      %cst_28 = arith.constant 0.000000e+00 : f32
      %50 = vector.broadcast %cst_28 : f32 to vector<2x8x512xf32>
      %c0_29 = arith.constant 0 : index
      %c0_30 = arith.constant 0 : index
      %c0_31 = arith.constant 0 : index
      %51 = vector.load %arg9[%c0_29, %c0_30, %c0_31] : memref<2x8x512xf32, #tpu.memory_space<vmem>>, vector<2x8x512xf32>
      tpu.vector_store %arg9[%c0_29, %c0_30, %c0_31], %50 {strides = array<i32>} : memref<2x8x512xf32, #tpu.memory_space<vmem>>, vector<2x8x512xf32>,
    } else {
    }
    %c0 = arith.constant 0 : index
    %c0_1 = arith.constant 0 : index
    %c0_2 = arith.constant 0 : index
    %3 = vector.load %arg2[%c0, %c0_1, %c0_2] : memref<2x16x32xf32, #tpu.memory_space<vmem>>, vector<2x16x32xf32>
    %4 = vector.shape_cast %3 : vector<2x16x32xf32> to vector<32x32xf32>
    %c0_3 = arith.constant 0 : index
    %c0_4 = arith.constant 0 : index
    %5 = vector.load %arg3[%c0_3, %c0_4] : memref<32x512xf32, #tpu.memory_space<vmem>>, vector<32x512xf32>
    %cst = arith.constant dense<0.000000e+00> : vector<32x512xf32>
    %6 = tpu.matmul %4, %5, %cst {dimension_numbers = #tpu.dot_dimension_numbers<[1], [0], [0], [1], [0, 0, 1, 1], [], []>} : vector<32x32xf32>, vector<32x512xf32>, vector<32x512xf32> -> vector<32x512xf32>
    %7 = vector.shape_cast %6 : vector<32x512xf32> to vector<2x16x512xf32>
    %c0_5 = arith.constant 0 : index
    %c0_6 = arith.constant 0 : index
    %c0_7 = arith.constant 0 : index
    %8 = vector.load %arg9[%c0_5, %c0_6, %c0_7] : memref<2x8x512xf32, #tpu.memory_space<vmem>>, vector<2x8x512xf32>
    %9 = tpu.concatenate %8, %7 in 1 : vector<2x8x512xf32>, vector<2x16x512xf32> -> vector<2x24x512xf32>
    %10 = vector.extract_strided_slice %9 {offsets = [0, 0, 0], sizes = [2, 16, 128], strides = [1, 1, 1]} : vector<2x24x512xf32> to vector<2x16x128xf32>
    %11 = vector.extract_strided_slice %9 {offsets = [0, 1, 128], sizes = [2, 16, 128], strides = [1, 1, 1]} : vector<2x24x512xf32> to vector<2x16x128xf32>
    %12 = arith.addf %10, %11 : vector<2x16x128xf32>
    %13 = vector.extract_strided_slice %9 {offsets = [0, 2, 256], sizes = [2, 16, 128], strides = [1, 1, 1]} : vector<2x24x512xf32> to vector<2x16x128xf32>
    %14 = arith.addf %12, %13 : vector<2x16x128xf32>
    %15 = vector.extract_strided_slice %9 {offsets = [0, 3, 384], sizes = [2, 16, 128], strides = [1, 1, 1]} : vector<2x24x512xf32> to vector<2x16x128xf32>
    %16 = arith.addf %14, %15 : vector<2x16x128xf32>
    %c0_8 = arith.constant 0 : index
    %c0_9 = arith.constant 0 : index
    %17 = vector.load %arg4[%c0_8, %c0_9] : memref<1x128xf32, #tpu.memory_space<vmem>>, vector<1x128xf32>
    %18 = vector.shape_cast %17 : vector<1x128xf32> to vector<1x1x128xf32>
    %19 = vector.broadcast %18 : vector<1x1x128xf32> to vector<2x16x128xf32>
    %20 = arith.addf %16, %19 : vector<2x16x128xf32>
    %cst_10 = arith.constant 0.000000e+00 : f32
    %21 = vector.broadcast %cst_10 : f32 to vector<2x16x128xf32>
    %22 = arith.maximumf %20, %21 : vector<2x16x128xf32>
    %c16_i32 = arith.constant 16 : i32
    %23 = arith.muli %arg1, %c16_i32 : i32
    %c8_i32 = arith.constant 8 : i32
    %24 = arith.subi %23, %c8_i32 : i32
    %25 = tpu.iota {dimensions = array<i32: 0>} : vector<16x128xi32>
    %26 = vector.broadcast %24 : i32 to vector<16x128xi32>
    %27 = arith.addi %25, %26 : vector<16x128xi32>
    %c0_i32_11 = arith.constant 0 : i32
    %28 = vector.broadcast %c0_i32_11 : i32 to vector<16x128xi32>
    %29 = arith.cmpi sge, %27, %28 : vector<16x128xi32>
    %c0_12 = arith.constant 0 : index
    %c0_13 = arith.constant 0 : index
    %30 = vector.load %arg5[%c0_12, %c0_13] : memref<1x128xi32, #tpu.memory_space<vmem>>, vector<1x128xi32>
    %31 = vector.broadcast %30 : vector<1x128xi32> to vector<16x128xi32>
    %32 = arith.cmpi sle, %27, %31 : vector<16x128xi32>
    %33 = arith.andi %29, %32 : vector<16x128xi1>
    %34 = vector.shape_cast %33 : vector<16x128xi1> to vector<1x16x128xi1>
    %cst_14 = arith.constant 0.000000e+00 : f32
    %35 = vector.shape_cast %34 : vector<1x16x128xi1> to vector<1x16x128xi1>
    %36 = vector.broadcast %35 : vector<1x16x128xi1> to vector<2x16x128xi1>
    %37 = vector.broadcast %cst_14 : f32 to vector<2x16x128xf32>
    %38 = arith.select %36, %22, %37 : vector<2x16x128xi1>, vector<2x16x128xf32>
    %c0_15 = arith.constant 0 : index
    %c0_16 = arith.constant 0 : index
    %39 = vector.load %arg10[%c0_15, %c0_16] : memref<2x128xf32, #tpu.memory_space<vmem>>, vector<2x128xf32>
    %cst_17 = arith.constant dense<0xFF800000> : vector<2x128xf32>
    %40 = vector.multi_reduction <maximumf>, %38, %cst_17 [1] : vector<2x16x128xf32> to vector<2x128xf32>
    %41 = arith.maximumf %39, %40 : vector<2x128xf32>
    %c0_18 = arith.constant 0 : index
    %c0_19 = arith.constant 0 : index
    %42 = vector.load %arg10[%c0_18, %c0_19] : memref<2x128xf32, #tpu.memory_space<vmem>>, vector<2x128xf32>
    tpu.vector_store %arg10[%c0_18, %c0_19], %41 {strides = array<i32>} : memref<2x128xf32, #tpu.memory_space<vmem>>, vector<2x128xf32>,
    %43 = vector.extract_strided_slice %7 {offsets = [0, 8, 0], sizes = [2, 8, 512], strides = [1, 1, 1]} : vector<2x16x512xf32> to vector<2x8x512xf32>
    %c0_20 = arith.constant 0 : index
    %c0_21 = arith.constant 0 : index
    %c0_22 = arith.constant 0 : index
    %44 = vector.load %arg9[%c0_20, %c0_21, %c0_22] : memref<2x8x512xf32, #tpu.memory_space<vmem>>, vector<2x8x512xf32>
    tpu.vector_store %arg9[%c0_20, %c0_21, %c0_22], %43 {strides = array<i32>} : memref<2x8x512xf32, #tpu.memory_space<vmem>>, vector<2x8x512xf32>,
    %c0_i32_23 = arith.constant 0 : i32
    %45 = arith.cmpi eq, %arg1, %c0_i32_23 : i32
    %46 = arith.extui %45 : i1 to i32
    %c0_i32_24 = arith.constant 0 : i32
    %47 = arith.cmpi ne, %46, %c0_i32_24 : i32
    scf.if %47 {
      %c0_25 = arith.constant 0 : index
      %c0_26 = arith.constant 0 : index
      %48 = vector.load %arg10[%c0_25, %c0_26] : memref<2x128xf32, #tpu.memory_space<vmem>>, vector<2x128xf32>
      %c0_27 = arith.constant 0 : index
      %c0_28 = arith.constant 0 : index
      %49 = vector.load %arg6[%c0_27, %c0_28] : memref<128x128xf32, #tpu.memory_space<vmem>>, vector<128x128xf32>
      %cst_29 = arith.constant dense<0.000000e+00> : vector<2x128xf32>
      %50 = tpu.matmul %48, %49, %cst_29 {dimension_numbers = #tpu.dot_dimension_numbers<[1], [0], [0], [1], [0, 0, 1, 1], [], []>} : vector<2x128xf32>, vector<128x128xf32>, vector<2x128xf32> -> vector<2x128xf32>
      %c0_30 = arith.constant 0 : index
      %c0_31 = arith.constant 0 : index
      %51 = vector.load %arg7[%c0_30, %c0_31] : memref<1x128xf32, #tpu.memory_space<vmem>>, vector<1x128xf32>
      %52 = vector.broadcast %51 : vector<1x128xf32> to vector<2x128xf32>
      %53 = arith.addf %50, %52 : vector<2x128xf32>
      %c0_32 = arith.constant 0 : index
      %c0_33 = arith.constant 0 : index
      %54 = vector.load %arg8[%c0_32, %c0_33] : memref<2x128xf32, #tpu.memory_space<vmem>>, vector<2x128xf32>
      tpu.vector_store %arg8[%c0_32, %c0_33], %53 {strides = array<i32>} : memref<2x128xf32, #tpu.memory_space<vmem>>, vector<2x128xf32>,
    } else {
    }
    return
  }
  func.func @transform_0(%arg0: i32, %arg1: i32) -> (i32, i32, i32) {
    %c0_i32 = arith.constant 0 : i32
    %c0_i32_0 = arith.constant 0 : i32
    return %arg0, %arg1, %c0_i32 : i32, i32, i32
  }
  func.func @transform_1(%arg0: i32, %arg1: i32) -> (i32, i32) {
    %c0_i32 = arith.constant 0 : i32
    %c0_i32_0 = arith.constant 0 : i32
    %c0_i32_1 = arith.constant 0 : i32
    return %c0_i32, %c0_i32_0 : i32, i32
  }
  func.func @transform_2(%arg0: i32, %arg1: i32) -> (i32, i32) {
    %c0_i32 = arith.constant 0 : i32
    %c0_i32_0 = arith.constant 0 : i32
    %c0_i32_1 = arith.constant 0 : i32
    return %c0_i32, %c0_i32_0 : i32, i32
  }
  func.func @transform_3(%arg0: i32, %arg1: i32) -> (i32, i32) {
    %c0_i32 = arith.constant 0 : i32
    %c0_i32_0 = arith.constant 0 : i32
    %c0_i32_1 = arith.constant 0 : i32
    return %c0_i32, %c0_i32_0 : i32, i32
  }
  func.func @transform_4(%arg0: i32, %arg1: i32) -> (i32, i32) {
    %c0_i32 = arith.constant 0 : i32
    %c0_i32_0 = arith.constant 0 : i32
    %c0_i32_1 = arith.constant 0 : i32
    return %c0_i32, %c0_i32_0 : i32, i32
  }
  func.func @transform_5(%arg0: i32, %arg1: i32) -> (i32, i32) {
    %c0_i32 = arith.constant 0 : i32
    %c0_i32_0 = arith.constant 0 : i32
    %c0_i32_1 = arith.constant 0 : i32
    return %c0_i32, %c0_i32_0 : i32, i32
  }
  func.func @transform_6(%arg0: i32, %arg1: i32) -> (i32, i32) {
    %c0_i32 = arith.constant 0 : i32
    %c0_i32_0 = arith.constant 0 : i32
    return %arg0, %c0_i32 : i32, i32
  }
}

</mosaic_0001>

<llo_original>
// kernel: tpu_custom_call.1
$region0: #{tpu_custom_call.1}
  #allocation0 [shape = 'u32[]', space=smem, size = 0x4, offset = 0x4, fixed_abs, tag = 'smem constant byte address 0x4 - core index']
  #allocation1 [shape = 'u32[144,128]{1,0:T(1,128)}', space=vmem, size = 0x12000, scoped, tag = 'internal scratch']
  #allocation2 [shape = 'f32[2,8,512]{2,1,0:T(8,128)}', space=vmem, size = 0x8000, scoped, tag = 'scratch operand']
  #allocation3 [shape = 'f32[2,128]{1,0:T(2,128)}', space=vmem, size = 0x400, scoped, tag = 'scratch operand']
  %s0 = inlined_call_operand.hbm [shape: f32[2,16,32], index: 0, kind: input, shape index: {}]
  %s1 = inlined_call_operand.hbm [shape: f32[32,512], index: 1, kind: input, shape index: {}]
  %s2 = inlined_call_operand.vmem [shape: f32[1,128], index: 2, kind: input, shape index: {}]
  %s3 = inlined_call_operand.vmem [shape: s32[1,128], index: 3, kind: input, shape index: {}]
  %s4 = inlined_call_operand.hbm [shape: f32[128,128], index: 4, kind: input, shape index: {}]
  %s5 = inlined_call_operand.vmem [shape: f32[1,128], index: 5, kind: input, shape index: {}]
  %s6 = inlined_call_operand.hbm [shape: f32[2,128], index: 6, kind: output, shape index: {}]
  %s7 = sld [smem:[#allocation0]]
  $region54: #{tpu_custom_call.1} parent=0
    _
  %s9 = ssub.s32 1, %s7
  %s10 = scalar_select 0, %s9, %s7
  $region1: #{tpu_custom_call.1} parent=0
    #allocation4 [shape = 'u8[16384]{0}', space=vmem, size = 0x4000, scoped, tag = 'input window, operand 0, single buffered']
    #allocation5 [shape = 's32[1]{0}', space=sflag, size = 0x4, scoped, tag = 'scoped memory for tpu_custom_call.1']
    #allocation6 [shape = 's32[1]{0}', space=sflag, size = 0x4, scoped, tag = 'scoped memory for tpu_custom_call.1']
    #allocation7 [shape = 'u8[65536]{0}', space=vmem, size = 0x10000, scoped, tag = 'input window, operand 1, single buffered']
    #allocation8 [shape = 's32[1]{0}', space=sflag, size = 0x4, scoped, tag = 'scoped memory for tpu_custom_call.1']
    #allocation9 [shape = 'u8[65536]{0}', space=vmem, size = 0x10000, scoped, tag = 'input window, operand 4, single buffered']
    #allocation10 [shape = 'u8[1024]{0}', space=vmem, size = 0x400, scoped, tag = 'output window, operand 0, single buffered']
    %11 = vsyncpa [#allocation5], 0
    %12 = vsyncpa [#allocation8], 0
    %13 = vsyncpa [#allocation6], 0
    // Predicated region
    $region2: #{tpu_custom_call.1} parent=1 // pred_check
      _
    $region3: #{tpu_custom_call.1} parent=1 // pred_check_branch
      %15 = sbr.rel (0) target = $region5
    $region4: #{tpu_custom_call.1} parent=1 // pred_region
      %s17 = ssub.s32 512, 512
      %18 = vsyncadd [#allocation5], %s17
      %s19 = sshll.u32 [#allocation4], 4
      %s20 = int_to_ptr.vmem [resolvable:$true] %s19
      %25 = dma.hbm_to_vmem [thread:$0]  %s0, 512, %s20, [#allocation5], 128, 128, 8
    $region5: #{tpu_custom_call.1} parent=1 // pred_fallthru
      _
    // Predicated region
    $region6: #{tpu_custom_call.1} parent=1 // pred_check
      _
    $region7: #{tpu_custom_call.1} parent=1 // pred_check_branch
      %27 = sbr.rel (0) target = $region9
    $region8: #{tpu_custom_call.1} parent=1 // pred_region
      %s29 = ssub.s32 2048, 2048
      %30 = vsyncadd [#allocation8], %s29
      %s31 = sshll.u32 [#allocation7], 4
      %s32 = int_to_ptr.vmem [resolvable:$true] %s31
      %37 = dma.hbm_to_vmem [thread:$0]  %s1, 2048, %s32, [#allocation8], 512, 512, 32
    $region9: #{tpu_custom_call.1} parent=1 // pred_fallthru
      _
    // Predicated region
    $region10: #{tpu_custom_call.1} parent=1 // pred_check
      _
    $region11: #{tpu_custom_call.1} parent=1 // pred_check_branch
      %39 = sbr.rel (0) target = $region13
    $region12: #{tpu_custom_call.1} parent=1 // pred_region
      _
    $region13: #{tpu_custom_call.1} parent=1 // pred_fallthru
      _
    // Predicated region
    $region14: #{tpu_custom_call.1} parent=1 // pred_check
      _
    $region15: #{tpu_custom_call.1} parent=1 // pred_check_branch
      %41 = sbr.rel (0) target = $region17
    $region16: #{tpu_custom_call.1} parent=1 // pred_region
      _
    $region17: #{tpu_custom_call.1} parent=1 // pred_fallthru
      _
    // Predicated region
    $region18: #{tpu_custom_call.1} parent=1 // pred_check
      _
    $region19: #{tpu_custom_call.1} parent=1 // pred_check_branch
      %43 = sbr.rel (0) target = $region21
    $region20: #{tpu_custom_call.1} parent=1 // pred_region
      %s45 = ssub.s32 2048, 2048
      %46 = vsyncadd [#allocation8], %s45
      %s47 = sshll.u32 [#allocation9], 4
      %s48 = int_to_ptr.vmem [resolvable:$true] %s47
      %53 = dma.hbm_to_vmem [thread:$0]  %s4, 2048, %s48, [#allocation8], 128, 128, 8
    $region21: #{tpu_custom_call.1} parent=1 // pred_fallthru
      _
    // Predicated region
    $region22: #{tpu_custom_call.1} parent=1 // pred_check
      _
    $region23: #{tpu_custom_call.1} parent=1 // pred_check_branch
      %55 = sbr.rel (0) target = $region25
    $region24: #{tpu_custom_call.1} parent=1 // pred_region
      _
    $region25: #{tpu_custom_call.1} parent=1 // pred_fallthru
      _
    // Predicated region
    $region26: #{tpu_custom_call.1} parent=1 // pred_check
      _
    $region27: #{tpu_custom_call.1} parent=1 // pred_check_branch
      %57 = sbr.rel (0) target = $region29
    $region28: #{tpu_custom_call.1} parent=1 // pred_region
      %58 = dma.done [#allocation5], 512
    $region29: #{tpu_custom_call.1} parent=1 // pred_fallthru
      _
    // Predicated region
    $region30: #{tpu_custom_call.1} parent=1 // pred_check
      _
    $region31: #{tpu_custom_call.1} parent=1 // pred_check_branch
      %60 = sbr.rel (0) target = $region33
    $region32: #{tpu_custom_call.1} parent=1 // pred_region
      %61 = dma.done [#allocation8], 2048
    $region33: #{tpu_custom_call.1} parent=1 // pred_fallthru
      _
    // Predicated region
    $region34: #{tpu_custom_call.1} parent=1 // pred_check
      _
    $region35: #{tpu_custom_call.1} parent=1 // pred_check_branch
      %63 = sbr.rel (0) target = $region37
    $region36: #{tpu_custom_call.1} parent=1 // pred_region
      %64 = dma.done [#allocation8], 2048
    $region37: #{tpu_custom_call.1} parent=1 // pred_fallthru
      _
    %p65 = scmp.eq.s32.totalorder 0, 0
    // Predicated region
    $region38: #{tpu_custom_call.1} parent=1 // pred_check
      %p66 = pneg %p65
    $region39: #{tpu_custom_call.1} parent=1 // pred_check_branch
      %68 = sbr.rel (%p66) target = $region41
    $region40: #{tpu_custom_call.1} parent=1 // pred_region
      %69 = vst [vmem:[#allocation3] sm:$0x3] 0.0
      %70 = vst [vmem:[#allocation2] sm:$0xff] 0.0
      %71 = vst [vmem:[#allocation2 + $0x8] sm:$0xff] 0.0
      %72 = vst [vmem:[#allocation2 + $0x10] sm:$0xff] 0.0
      %73 = vst [vmem:[#allocation2 + $0x18] sm:$0xff] 0.0
      %74 = vst [vmem:[#allocation2 + $0x20] sm:$0xff] 0.0
      %75 = vst [vmem:[#allocation2 + $0x28] sm:$0xff] 0.0
      %76 = vst [vmem:[#allocation2 + $0x30] sm:$0xff] 0.0
      %77 = vst [vmem:[#allocation2 + $0x38] sm:$0xff] 0.0
    $region41: #{tpu_custom_call.1} parent=1 // pred_fallthru
      _
    %v78 = vld [vmem:[#allocation4] sm:$0xff]
    %v79 = vld [vmem:[#allocation4 + $0x8] sm:$0xff]
    %v80 = vld [vmem:[#allocation4 + $0x10] sm:$0xff]
    %v81 = vld [vmem:[#allocation4 + $0x18] sm:$0xff]
    %v82 = vld [vmem:[#allocation7] sm:$0xff]
    %v83 = vld [vmem:[#allocation7 + $0x8] sm:$0xff]
    %v84 = vld [vmem:[#allocation7 + $0x10] sm:$0xff]
    %v85 = vld [vmem:[#allocation7 + $0x18] sm:$0xff]
    %v86 = vld [vmem:[#allocation7 + $0x20] sm:$0xff]
    %v87 = vld [vmem:[#allocation7 + $0x28] sm:$0xff]
    %v88 = vld [vmem:[#allocation7 + $0x30] sm:$0xff]
    %v89 = vld [vmem:[#allocation7 + $0x38] sm:$0xff]
    %v90 = vld [vmem:[#allocation7 + $0x40] sm:$0xff]
    %v91 = vld [vmem:[#allocation7 + $0x48] sm:$0xff]
    %v92 = vld [vmem:[#allocation7 + $0x50] sm:$0xff]
    %v93 = vld [vmem:[#allocation7 + $0x58] sm:$0xff]
    %v94 = vld [vmem:[#allocation7 + $0x60] sm:$0xff]
    %v95 = vld [vmem:[#allocation7 + $0x68] sm:$0xff]
    %v96 = vld [vmem:[#allocation7 + $0x70] sm:$0xff]
    %v97 = vld [vmem:[#allocation7 + $0x78] sm:$0xff]
    %vm98 = vcmask 261120
    %v100 = vsel %vm98, %v78, 0
    %v103 = vsel %vm98, %v79, 0
    %v106 = vsel %vm98, %v80, 0
    %v109 = vsel %vm98, %v81, 0
    %111 = vmatprep.subr.mxu0 0.0
    %112 = vmatpush1.msra.mxu0 0.0
    %113 = vmatprep.subr.mxu0 0.0
    %114 = vmatpush1.msra.mxu0 0.0
    %115 = vmatprep.subr.mxu0 0.0
    %116 = vmatpush1.msra.mxu0 0.0
    %117 = vmatprep.subr.mxu0 0.0
    %118 = vmatpush1.msra.mxu0 0.0
    %119 = vmatprep.subr.mxu0 0.0
    %120 = vmatpush1.msra.mxu0 0.0
    %121 = vmatprep.subr.mxu0 0.0
    %122 = vmatpush1.msra.mxu0 0.0
    %123 = vmatprep.subr.mxu0 0.0
    %124 = vmatpush1.msra.mxu0 0.0
    %125 = vmatprep.subr.mxu0 0.0
    %126 = vmatpush1.msra.mxu0 0.0
    %127 = vmatprep.subr.mxu0 0.0
    %128 = vmatpush1.msra.mxu0 0.0
    %129 = vmatprep.subr.mxu0 0.0
    %130 = vmatpush1.msra.mxu0 0.0
    %131 = vmatprep.subr.mxu0 0.0
    %132 = vmatpush1.msra.mxu0 0.0
    %133 = vmatprep.subr.mxu0 0.0
    %134 = vmatpush1.msra.mxu0 0.0
    %135 = vmatprep.subr.mxu0 %v95
    %136 = vmatpush1.msra.mxu0 %v94
    %137 = vmatprep.subr.mxu0 %v91
    %138 = vmatpush1.msra.mxu0 %v90
    %139 = vmatprep.subr.mxu0 %v87
    %140 = vmatpush1.msra.mxu0 %v86
    %141 = vmatprep.subr.mxu0 %v83
    %142 = vmatpush1.msra.mxu0 %v82
    %143 = vmatprep.subr.mxu0 0.0
    %144 = vmatpush2.msra.mxu0 0.0
    %145 = vmatprep.subr.mxu0 0.0
    %146 = vmatpush2.msra.mxu0 0.0
    %147 = vmatprep.subr.mxu0 0.0
    %148 = vmatpush2.msra.mxu0 0.0
    %149 = vmatprep.subr.mxu0 0.0
    %150 = vmatpush2.msra.mxu0 0.0
    %151 = vmatprep.subr.mxu0 0.0
    %152 = vmatpush2.msra.mxu0 0.0
    %153 = vmatprep.subr.mxu0 0.0
    %154 = vmatpush2.msra.mxu0 0.0
    %155 = vmatprep.subr.mxu0 0.0
    %156 = vmatpush2.msra.mxu0 0.0
    %157 = vmatprep.subr.mxu0 0.0
    %158 = vmatpush2.msra.mxu0 0.0
    %159 = vmatprep.subr.mxu0 0.0
    %160 = vmatpush2.msra.mxu0 0.0
    %161 = vmatprep.subr.mxu0 0.0
    %162 = vmatpush2.msra.mxu0 0.0
    %163 = vmatprep.subr.mxu0 0.0
    %164 = vmatpush2.msra.mxu0 0.0
    %165 = vmatprep.subr.mxu0 0.0
    %166 = vmatpush2.msra.mxu0 0.0
    %167 = vmatprep.subr.mxu0 0.0
    %168 = vmatpush2.msra.mxu0 0.0
    %169 = vmatprep.subr.mxu0 0.0
    %170 = vmatpush2.msra.mxu0 0.0
    %171 = vmatprep.subr.mxu0 0.0
    %172 = vmatpush2.msra.mxu0 0.0
    %173 = vmatprep.subr.mxu0 0.0
    %174 = vmatpush2.msra.mxu0 0.0
    %175 = vmatprep.mubr.f32.mxu0 0.0
    %176 = vmatmul.mubr.f32.gmra.mxu0 %v100
    %v177 = vpop.f32.mrf.mxu0
    %v178 = vadd.f32 0.0, %v177
    %v179 = vpop.f32.mrf.mxu0
    %v180 = vadd.f32 0.0, %v179
    %181 = vmatprep.mubr.f32.mxu0 0.0
    %182 = vmatmul.mubr.f32.gmra.mxu0 %v103
    %v183 = vpop.f32.mrf.mxu0
    %v184 = vadd.f32 0.0, %v183
    %v185 = vpop.f32.mrf.mxu0
    %v186 = vadd.f32 0.0, %v185
    %187 = vmatprep.mubr.f32.mxu0 0.0
    %188 = vmatmul.mubr.f32.gmra.mxu0 %v106
    %v189 = vpop.f32.mrf.mxu0
    %v190 = vadd.f32 0.0, %v189
    %v191 = vpop.f32.mrf.mxu0
    %v192 = vadd.f32 0.0, %v191
    %193 = vmatprep.mubr.f32.mxu0 0.0
    %194 = vmatmul.mubr.f32.gmra.mxu0 %v109
    %v195 = vpop.f32.mrf.mxu0
    %v196 = vadd.f32 0.0, %v195
    %v197 = vpop.f32.mrf.mxu0
    %v198 = vadd.f32 0.0, %v197
    %199 = vdwg.mxu0
    %200 = vmatprep.subr.mxu0 0.0
    %201 = vmatpush1.msra.mxu0 0.0
    %202 = vmatprep.subr.mxu0 0.0
    %203 = vmatpush1.msra.mxu0 0.0
    %204 = vmatprep.subr.mxu0 0.0
    %205 = vmatpush1.msra.mxu0 0.0
    %206 = vmatprep.subr.mxu0 0.0
    %207 = vmatpush1.msra.mxu0 0.0
    %208 = vmatprep.subr.mxu0 0.0
    %209 = vmatpush1.msra.mxu0 0.0
    %210 = vmatprep.subr.mxu0 0.0
    %211 = vmatpush1.msra.mxu0 0.0
    %212 = vmatprep.subr.mxu0 0.0
    %213 = vmatpush1.msra.mxu0 0.0
    %214 = vmatprep.subr.mxu0 0.0
    %215 = vmatpush1.msra.mxu0 0.0
    %216 = vmatprep.subr.mxu0 0.0
    %217 = vmatpush1.msra.mxu0 0.0
    %218 = vmatprep.subr.mxu0 0.0
    %219 = vmatpush1.msra.mxu0 0.0
    %220 = vmatprep.subr.mxu0 0.0
    %221 = vmatpush1.msra.mxu0 0.0
    %222 = vmatprep.subr.mxu0 0.0
    %223 = vmatpush1.msra.mxu0 0.0
    %224 = vmatprep.subr.mxu0 %v97
    %225 = vmatpush1.msra.mxu0 %v96
    %226 = vmatprep.subr.mxu0 %v93
    %227 = vmatpush1.msra.mxu0 %v92
    %228 = vmatprep.subr.mxu0 %v89
    %229 = vmatpush1.msra.mxu0 %v88
    %230 = vmatprep.subr.mxu0 %v85
    %231 = vmatpush1.msra.mxu0 %v84
    %232 = vmatprep.subr.mxu0 0.0
    %233 = vmatpush2.msra.mxu0 0.0
    %234 = vmatprep.subr.mxu0 0.0
    %235 = vmatpush2.msra.mxu0 0.0
    %236 = vmatprep.subr.mxu0 0.0
    %237 = vmatpush2.msra.mxu0 0.0
    %238 = vmatprep.subr.mxu0 0.0
    %239 = vmatpush2.msra.mxu0 0.0
    %240 = vmatprep.subr.mxu0 0.0
    %241 = vmatpush2.msra.mxu0 0.0
    %242 = vmatprep.subr.mxu0 0.0
    %243 = vmatpush2.msra.mxu0 0.0
    %244 = vmatprep.subr.mxu0 0.0
    %245 = vmatpush2.msra.mxu0 0.0
    %246 = vmatprep.subr.mxu0 0.0
    %247 = vmatpush2.msra.mxu0 0.0
    %248 = vmatprep.subr.mxu0 0.0
    %249 = vmatpush2.msra.mxu0 0.0
    %250 = vmatprep.subr.mxu0 0.0
    %251 = vmatpush2.msra.mxu0 0.0
    %252 = vmatprep.subr.mxu0 0.0
    %253 = vmatpush2.msra.mxu0 0.0
    %254 = vmatprep.subr.mxu0 0.0
    %255 = vmatpush2.msra.mxu0 0.0
    %256 = vmatprep.subr.mxu0 0.0
    %257 = vmatpush2.msra.mxu0 0.0
    %258 = vmatprep.subr.mxu0 0.0
    %259 = vmatpush2.msra.mxu0 0.0
    %260 = vmatprep.subr.mxu0 0.0
    %261 = vmatpush2.msra.mxu0 0.0
    %262 = vmatprep.subr.mxu0 0.0
    %263 = vmatpush2.msra.mxu0 0.0
    %264 = vmatprep.mubr.f32.mxu0 0.0
    %265 = vmatmul.mubr.f32.gmra.mxu0 %v100
    %v266 = vpop.f32.mrf.mxu0
    %v267 = vadd.f32 0.0, %v266
    %v268 = vpop.f32.mrf.mxu0
    %v269 = vadd.f32 0.0, %v268
    %270 = vmatprep.mubr.f32.mxu0 0.0
    %271 = vmatmul.mubr.f32.gmra.mxu0 %v103
    %v272 = vpop.f32.mrf.mxu0
    %v273 = vadd.f32 0.0, %v272
    %v274 = vpop.f32.mrf.mxu0
    %v275 = vadd.f32 0.0, %v274
    %276 = vmatprep.mubr.f32.mxu0 0.0
    %277 = vmatmul.mubr.f32.gmra.mxu0 %v106
    %v278 = vpop.f32.mrf.mxu0
    %v279 = vadd.f32 0.0, %v278
    %v280 = vpop.f32.mrf.mxu0
    %v281 = vadd.f32 0.0, %v280
    %282 = vmatprep.mubr.f32.mxu0 0.0
    %283 = vmatmul.mubr.f32.gmra.mxu0 %v109
    %v284 = vpop.f32.mrf.mxu0
    %v285 = vadd.f32 0.0, %v284
    %v286 = vpop.f32.mrf.mxu0
    %v287 = vadd.f32 0.0, %v286
    %288 = vdwg.mxu0
    %v289 = vld [vmem:[#allocation2] sm:$0xff]
    %v290 = vld [vmem:[#allocation2 + $0x8] sm:$0xff]
    %v291 = vld [vmem:[#allocation2 + $0x10] sm:$0xff]
    %v292 = vld [vmem:[#allocation2 + $0x18] sm:$0xff]
    %v293 = vld [vmem:[#allocation2 + $0x20] sm:$0xff]
    %v294 = vld [vmem:[#allocation2 + $0x28] sm:$0xff]
    %v295 = vld [vmem:[#allocation2 + $0x30] sm:$0xff]
    %v296 = vld [vmem:[#allocation2 + $0x38] sm:$0xff]
    %vm303 = vcmask 1046528
    %v304 = vrot.slane %v290, 1
    %v305 = vrot.slane %v180, 1
    %v306 = vsel %vm303, %v304, %v305
    %v307 = vrot.slane %v186, 1
    %v308 = vsel %vm303, %v305, %v307
    %v309 = vrot.slane %v294, 1
    %v310 = vrot.slane %v192, 1
    %v311 = vsel %vm303, %v309, %v310
    %v312 = vrot.slane %v198, 1
    %v313 = vsel %vm303, %v310, %v312
    %v318 = vadd.f32 %v289, %v306
    %v319 = vadd.f32 %v178, %v308
    %v320 = vadd.f32 %v293, %v311
    %v321 = vadd.f32 %v190, %v313
    %vm328 = vcmask 1045504
    %v329 = vrot.slane %v291, 2
    %v330 = vrot.slane %v267, 2
    %v331 = vsel %vm328, %v329, %v330
    %v332 = vrot.slane %v273, 2
    %v333 = vsel %vm328, %v330, %v332
    %v334 = vrot.slane %v295, 2
    %v335 = vrot.slane %v279, 2
    %v336 = vsel %vm328, %v334, %v335
    %v337 = vrot.slane %v285, 2
    %v338 = vsel %vm328, %v335, %v337
    %v343 = vadd.f32 %v318, %v331
    %v344 = vadd.f32 %v319, %v333
    %v345 = vadd.f32 %v320, %v336
    %v346 = vadd.f32 %v321, %v338
    %vm353 = vcmask 1044480
    %v354 = vrot.slane %v292, 3
    %v355 = vrot.slane %v269, 3
    %v356 = vsel %vm353, %v354, %v355
    %v357 = vrot.slane %v275, 3
    %v358 = vsel %vm353, %v355, %v357
    %v359 = vrot.slane %v296, 3
    %v360 = vrot.slane %v281, 3
    %v361 = vsel %vm353, %v359, %v360
    %v362 = vrot.slane %v287, 3
    %v363 = vsel %vm353, %v360, %v362
    %v368 = vadd.f32 %v343, %v356
    %v369 = vadd.f32 %v344, %v358
    %v370 = vadd.f32 %v345, %v361
    %v371 = vadd.f32 %v346, %v363
    %v372 = vld [vmem:[%s2] sm:$0x1]
    %v374 = vlaneseq
    %v375 = vshrl.u32 %v374, 7
    %v376 = vsub.s32 0, %v375
    %v377 = vrot.slane %v372, %v376
    %v379 = vadd.f32 %v368, %v377
    %v380 = vadd.f32 %v369, %v377
    %v381 = vadd.f32 %v370, %v377
    %v382 = vadd.f32 %v371, %v377
    %v383 = vmax.f32 %v379, 0.0
    %v384 = vmax.f32 %v380, 0.0
    %v385 = vmax.f32 %v381, 0.0
    %v386 = vmax.f32 %v382, 0.0
    %s387 = smul.u32 0, 16
    %s388 = ssub.s32 %s387, 8
    %v389 = vlaneseq
    %v390 = vshrl.u32 %v389, 7
    %v391 = vadd.s32 %v390, 8
    %v392 = vstv %s388
    %v393 = vadd.s32 %v390, %v392
    %v394 = vadd.s32 %v391, %v392
    %vm395 = vcmp.ge.s32.totalorder %v393, 0
    %vm396 = vcmp.ge.s32.totalorder %v394, 0
    %v397 = vld [vmem:[%s3] sm:$0x1]
    %v398 = vlaneseq
    %v399 = vshrl.u32 %v398, 7
    %v400 = vsub.s32 0, %v399
    %v401 = vrot.slane %v397, %v400
    %vm402 = vcmp.le.s32.totalorder %v393, %v401
    %vm403 = vcmp.le.s32.totalorder %v394, %v401
    %vm404 = vmand %vm395, %vm402
    %vm405 = vmand %vm396, %vm403
    %v406 = vsel %vm404, 1, 0
    %v407 = vsel %vm405, 1, 0
    %vm408 = vcmp.eq.s32.totalorder %v406, 1
    %vm409 = vcmp.eq.s32.totalorder %v407, 1
    %v410 = vsel %vm408, %v383, 0.0
    %v411 = vsel %vm409, %v384, 0.0
    %v412 = vsel %vm408, %v385, 0.0
    %v413 = vsel %vm409, %v386, 0.0
    %v414 = vld [vmem:[#allocation3] sm:$0x3]
    %v415 = vmax.f32 %v410, %v411
    %v416 = vrot.slane %v415, 4
    %v417 = vmax.f32 %v415, %v416
    %v418 = vrot.slane %v417, 2
    %v419 = vmax.f32 %v417, %v418
    %v420 = vrot.slane %v419, 1
    %v421 = vmax.f32 %v419, %v420
    %v422 = vmax.f32 %v412, %v413
    %v423 = vrot.slane %v422, 4
    %v424 = vmax.f32 %v422, %v423
    %v425 = vrot.slane %v424, 2
    %v426 = vmax.f32 %v424, %v425
    %v427 = vrot.slane %v426, 1
    %v428 = vmax.f32 %v426, %v427
    %vm431 = vcmask 1041409
    %v432 = vsel %vm431, %v428, %v421
    %v434 = vmax.f32 %v414, %v432
    %435 = vst [vmem:[#allocation3] sm:$0x3] %v434
    %436 = vst [vmem:[#allocation2] sm:$0xff] %v184
    %437 = vst [vmem:[#allocation2 + $0x8] sm:$0xff] %v186
    %438 = vst [vmem:[#allocation2 + $0x10] sm:$0xff] %v273
    %439 = vst [vmem:[#allocation2 + $0x18] sm:$0xff] %v275
    %440 = vst [vmem:[#allocation2 + $0x20] sm:$0xff] %v196
    %441 = vst [vmem:[#allocation2 + $0x28] sm:$0xff] %v198
    %442 = vst [vmem:[#allocation2 + $0x30] sm:$0xff] %v285
    %443 = vst [vmem:[#allocation2 + $0x38] sm:$0xff] %v287
    // Predicated region
    $region42: #{tpu_custom_call.1} parent=1 // pred_check
      %p444 = pneg %p65
    $region43: #{tpu_custom_call.1} parent=1 // pred_check_branch
      %446 = sbr.rel (%p444) target = $region45
    $region44: #{tpu_custom_call.1} parent=1 // pred_region
      %v447 = vld [vmem:[#allocation3] sm:$0x3]
      %v448 = vld [vmem:[#allocation9] sm:$0xff]
      %v449 = vld [vmem:[#allocation9 + $0x8] sm:$0xff]
      %v450 = vld [vmem:[#allocation9 + $0x10] sm:$0xff]
      %v451 = vld [vmem:[#allocation9 + $0x18] sm:$0xff]
      %v452 = vld [vmem:[#allocation9 + $0x20] sm:$0xff]
      %v453 = vld [vmem:[#allocation9 + $0x28] sm:$0xff]
      %v454 = vld [vmem:[#allocation9 + $0x30] sm:$0xff]
      %v455 = vld [vmem:[#allocation9 + $0x38] sm:$0xff]
      %v456 = vld [vmem:[#allocation9 + $0x40] sm:$0xff]
      %v457 = vld [vmem:[#allocation9 + $0x48] sm:$0xff]
      %v458 = vld [vmem:[#allocation9 + $0x50] sm:$0xff]
      %v459 = vld [vmem:[#allocation9 + $0x58] sm:$0xff]
      %v460 = vld [vmem:[#allocation9 + $0x60] sm:$0xff]
      %v461 = vld [vmem:[#allocation9 + $0x68] sm:$0xff]
      %v462 = vld [vmem:[#allocation9 + $0x70] sm:$0xff]
      %v463 = vld [vmem:[#allocation9 + $0x78] sm:$0xff]
      %v464 = vld [vmem:[%s5] sm:$0x1]
      %v466 = vlaneseq
      %v467 = vshrl.u32 %v466, 7
      %v468 = vsub.s32 0, %v467
      %v469 = vrot.slane %v464, %v468
      %471 = vmatprep.subr.mxu0 0.0
      %472 = vmatpush1.msra.mxu0 %v463
      %473 = vmatprep.subr.mxu0 0.0
      %474 = vmatpush1.msra.mxu0 %v462
      %475 = vmatprep.subr.mxu0 0.0
      %476 = vmatpush1.msra.mxu0 %v461
      %477 = vmatprep.subr.mxu0 0.0
      %478 = vmatpush1.msra.mxu0 %v460
      %479 = vmatprep.subr.mxu0 0.0
      %480 = vmatpush1.msra.mxu0 %v459
      %481 = vmatprep.subr.mxu0 0.0
      %482 = vmatpush1.msra.mxu0 %v458
      %483 = vmatprep.subr.mxu0 0.0
      %484 = vmatpush1.msra.mxu0 %v457
      %485 = vmatprep.subr.mxu0 0.0
      %486 = vmatpush1.msra.mxu0 %v456
      %487 = vmatprep.subr.mxu0 0.0
      %488 = vmatpush1.msra.mxu0 %v455
      %489 = vmatprep.subr.mxu0 0.0
      %490 = vmatpush1.msra.mxu0 %v454
      %491 = vmatprep.subr.mxu0 0.0
      %492 = vmatpush1.msra.mxu0 %v453
      %493 = vmatprep.subr.mxu0 0.0
      %494 = vmatpush1.msra.mxu0 %v452
      %495 = vmatprep.subr.mxu0 0.0
      %496 = vmatpush1.msra.mxu0 %v451
      %497 = vmatprep.subr.mxu0 0.0
      %498 = vmatpush1.msra.mxu0 %v450
      %499 = vmatprep.subr.mxu0 0.0
      %500 = vmatpush1.msra.mxu0 %v449
      %501 = vmatprep.subr.mxu0 0.0
      %502 = vmatpush1.msra.mxu0 %v448
      %503 = vmatprep.subr.mxu0 0.0
      %504 = vmatpush2.msra.mxu0 0.0
      %505 = vmatprep.subr.mxu0 0.0
      %506 = vmatpush2.msra.mxu0 0.0
      %507 = vmatprep.subr.mxu0 0.0
      %508 = vmatpush2.msra.mxu0 0.0
      %509 = vmatprep.subr.mxu0 0.0
      %510 = vmatpush2.msra.mxu0 0.0
      %511 = vmatprep.subr.mxu0 0.0
      %512 = vmatpush2.msra.mxu0 0.0
      %513 = vmatprep.subr.mxu0 0.0
      %514 = vmatpush2.msra.mxu0 0.0
      %515 = vmatprep.subr.mxu0 0.0
      %516 = vmatpush2.msra.mxu0 0.0
      %517 = vmatprep.subr.mxu0 0.0
      %518 = vmatpush2.msra.mxu0 0.0
      %519 = vmatprep.subr.mxu0 0.0
      %520 = vmatpush2.msra.mxu0 0.0
      %521 = vmatprep.subr.mxu0 0.0
      %522 = vmatpush2.msra.mxu0 0.0
      %523 = vmatprep.subr.mxu0 0.0
      %524 = vmatpush2.msra.mxu0 0.0
      %525 = vmatprep.subr.mxu0 0.0
      %526 = vmatpush2.msra.mxu0 0.0
      %527 = vmatprep.subr.mxu0 0.0
      %528 = vmatpush2.msra.mxu0 0.0
      %529 = vmatprep.subr.mxu0 0.0
      %530 = vmatpush2.msra.mxu0 0.0
      %531 = vmatprep.subr.mxu0 0.0
      %532 = vmatpush2.msra.mxu0 0.0
      %533 = vmatprep.subr.mxu0 0.0
      %534 = vmatpush2.msra.mxu0 0.0
      %535 = vmatprep.mubr.f32.mxu0 0.0
      %536 = vmatmul.mubr.f32.gmra.mxu0 %v447
      %v537 = vpop.f32.mrf.mxu0
      %v538 = vadd.f32 %v469, %v537
      %v539 = vpop.f32.mrf.mxu0
      %540 = vdwg.mxu0
      %541 = vst [vmem:[#allocation10] sm:$0x3] %v538
    $region45: #{tpu_custom_call.1} parent=1 // pred_fallthru
      _
    // Predicated region
    $region46: #{tpu_custom_call.1} parent=1 // pred_check
      _
    $region47: #{tpu_custom_call.1} parent=1 // pred_check_branch
      %543 = sbr.rel (0) target = $region49
    $region48: #{tpu_custom_call.1} parent=1 // pred_region
      %s545 = ssub.s32 32, 32
      %546 = vsyncadd [#allocation6], %s545
      %s548 = sshll.u32 [#allocation10], 4
      %s549 = int_to_ptr.vmem [resolvable:$true] %s548
      %551 = dma.vmem_to_hbm [thread:$0]  %s549, 32, %s6, [#allocation6]
    $region49: #{tpu_custom_call.1} parent=1 // pred_fallthru
      _
    // Predicated region
    $region50: #{tpu_custom_call.1} parent=1 // pred_check
      _
    $region51: #{tpu_custom_call.1} parent=1 // pred_check_branch
      %553 = sbr.rel (0) target = $region53
    $region52: #{tpu_custom_call.1} parent=1 // pred_region
      %554 = dma.done [#allocation6], 32
    $region53: #{tpu_custom_call.1} parent=1 // pred_fallthru
      _
    %555 = vsyncpa [#allocation5], 1
    %556 = vsyncpa [#allocation8], 1
    %557 = vsyncpa [#allocation6], 1

</llo_original>
